<compile_context>
chip_gen: v6e
topology: v6e:2x2x1
jax: 0.10.0
libtpu: 0.0.40
codegen_flags: <defaults>
</compile_context>

<pallas_src>
import functools

import jax
import jax.numpy as jnp
from jax.experimental import pallas as pl
from jax.experimental.pallas import tpu as pltpu

LANE = 128


def _round_up(x: int, m: int) -> int:
    return ((x + m - 1) // m) * m


def _sublane(dtype) -> int:
    """Native sublane packing for a dtype: 8 (f32), 16 (bf16), 32 (1-byte)."""
    itemsize = jnp.dtype(dtype).itemsize
    if itemsize >= 4:
        return 8
    if itemsize == 2:
        return 16
    return 32


def _vmem_capacity_bytes() -> int:
    try:
        cap = int(pltpu.get_tpu_info().vmem_capacity_bytes)
        if cap > 0:
            return cap
    except Exception:
        pass
    return 64 << 20  # conservative fallback (v7x per-TC capacity)


def _pick_feature_tile(total: int, pref: int = 512) -> int:
    """Largest multiple of 128 <= pref that divides `total` (total is a 128-multiple)."""
    if total <= pref:
        return total
    t = (pref // LANE) * LANE
    while t > LANE and total % t != 0:
        t -= LANE
    return t


# --------------------------------------------------------------------------- #
# Kernels
# --------------------------------------------------------------------------- #
def _fused_mlp_kernel(num_layers, *refs):
    """Fused MLP forward for one batch tile.

    refs = (x_ref, w0, b0, w1, b1, ..., w_{L-1}, b_{L-1}, o_ref).
    All matmuls + bias adds + ReLUs run inside one kernel invocation; weights are
    fully resident (single-buffered) in VMEM.
    """
    x_ref = refs[0]
    o_ref = refs[-1]
    params = refs[1:-1]  # interleaved (w, b) pairs

    h = x_ref[...]
    for li in range(num_layers):
        w = params[2 * li][...]
        b = params[2 * li + 1][...]  # (1, out) -- broadcasts over batch rows
        # Cast activations to the weight dtype (bf16 fast path); always accumulate
        # in f32 on the MXU.  Bias add stays in f32.
        h = jnp.dot(h.astype(w.dtype), w, preferred_element_type=jnp.float32)
        h = h + b.astype(jnp.float32)
        if 0 < li < num_layers - 1:  # ReLU only after the middle layers
            h = jnp.maximum(h, 0.0)
    o_ref[...] = h.astype(o_ref.dtype)


def _tiled_linear_kernel(x_ref, w_ref, b_ref, o_ref, acc_ref, *, apply_relu):
    """One (tm, tn) output tile of y = x @ W + b (+ ReLU), K-tiled with f32 acc."""
    k = pl.program_id(2)

    @pl.when(k == 0)
    def _():
        acc_ref[...] = jnp.zeros_like(acc_ref)

    acc_ref[...] += jnp.dot(x_ref[...], w_ref[...],
                            preferred_element_type=jnp.float32)

    @pl.when(k == pl.num_programs(2) - 1)
    def _():
        r = acc_ref[...] + b_ref[...].astype(jnp.float32)
        if apply_relu:
            r = jnp.maximum(r, 0.0)
        o_ref[...] = r.astype(o_ref.dtype)


def _tiled_linear(x, w, b, *, apply_relu, out_dtype, tm, vmem_limit):
    """Per-layer K/N-tiled linear; used when resident weights exceed the VMEM budget."""
    M, K = x.shape
    _, N = w.shape
    tn = _pick_feature_tile(N)
    tk = _pick_feature_tile(K)
    grid = (M // tm, N // tn, K // tk)

    flops = 2 * M * K * N
    bytes_accessed = (M * K * x.dtype.itemsize + K * N * w.dtype.itemsize
                      + N * 4 + M * N * jnp.dtype(out_dtype).itemsize)

    return pl.pallas_call(
        functools.partial(_tiled_linear_kernel, apply_relu=apply_relu),
        out_shape=jax.ShapeDtypeStruct((M, N), out_dtype),
        grid_spec=pltpu.PrefetchScalarGridSpec(
            num_scalar_prefetch=0,
            grid=grid,
            in_specs=[
                pl.BlockSpec((tm, tk), lambda i, j, k: (i, k)),
                pl.BlockSpec((tk, tn), lambda i, j, k: (k, j)),
                pl.BlockSpec((1, tn), lambda i, j, k: (0, j)),
            ],
            out_specs=pl.BlockSpec((tm, tn), lambda i, j, k: (i, j)),
            scratch_shapes=[pltpu.VMEM((tm, tn), jnp.float32)],
        ),
        compiler_params=pltpu.CompilerParams(
            dimension_semantics=("parallel", "parallel", "arbitrary"),
            vmem_limit_bytes=int(vmem_limit),
        ),
        cost_estimate=pl.CostEstimate(flops=flops, transcendentals=0,
                                      bytes_accessed=bytes_accessed),
    )(x, w, b)


# --------------------------------------------------------------------------- #
# Wrapper
# --------------------------------------------------------------------------- #
class PallasMLP:
    """Fused Pallas MLP.  Pads + casts parameters once at construction time."""

    def __init__(self, weights, biases, *, compute_dtype=jnp.bfloat16,
                 out_dtype=None, batch_tile=None):
        num_layers = len(weights)
        assert num_layers >= 2, "MLP module always has >= 2 Linear layers"
        ins = [w.shape[0] for w in weights]
        outs = [w.shape[1] for w in weights]
        assert all(ins[i] == outs[i - 1] for i in range(1, num_layers))

        self.num_layers = num_layers
        self.in_dim = ins[0]
        self.out_dim = outs[-1]
        self.compute_dtype = jnp.dtype(compute_dtype)
        self.out_dtype = jnp.dtype(out_dtype) if out_dtype is not None else None
        self.batch_tile = batch_tile

        # ---- feature dims padded to lane width (zero padding is numerically exact)
        self.in_p = _round_up(ins[0], LANE)
        self.outs_p = [_round_up(o, LANE) for o in outs]
        self.ins_p = [self.in_p] + self.outs_p[:-1]

        # ---- pad + cast parameters ONCE (no per-call HBM copies of the weights)
        self.w_pad, self.b_pad = [], []
        for i, (w, b) in enumerate(zip(weights, biases)):
            wp = jnp.zeros((self.ins_p[i], self.outs_p[i]), self.compute_dtype)
            wp = wp.at[: w.shape[0], : w.shape[1]].set(
                jnp.asarray(w, self.compute_dtype))
            bp = jnp.zeros((1, self.outs_p[i]), jnp.float32)
            bp = bp.at[0, : b.shape[0]].set(jnp.asarray(b, jnp.float32))
            self.w_pad.append(wp)
            self.b_pad.append(bp)

        self.vmem_cap = _vmem_capacity_bytes()
        # ~75% of capacity: ~96 MiB on v5e/v6e (128 MiB), ~48 MiB on v7x (64 MiB/TC).
        self.vmem_budget = max(int(self.vmem_cap * 0.75), 32 << 20)

        w_item = self.compute_dtype.itemsize
        self._param_bytes = sum(ip * op * w_item + op * 4
                                for ip, op in zip(self.ins_p, self.outs_p))
        self._widest = max([self.in_p] + self.outs_p)

    # ---------------------------------------------------------------- helpers
    def _default_batch_tile(self, B: int, sub: int) -> int:
        big_vmem = self.vmem_cap >= (96 << 20)   # v5e/v6e vs v7x per-TC
        cap = 1024 if big_vmem else 256
        if B < 4 * sub:
            return _round_up(max(B, sub), sub)           # tiny batch: single step
        if B <= 2 * cap:
            return _round_up(-(-B // 2), sub)            # >= 2 steps (2 TCs on v7x)
        return cap                                       # many steps -> DMA overlap

    def _estimate(self, bt: int, x_item: int, out_item: int) -> int:
        io = 2 * bt * (self.in_p * x_item + self.outs_p[-1] * out_item)
        act = 2 * bt * self._widest * 4       # two live f32 activations per layer
        return self._param_bytes + io + act

    def _maybe_pad_x(self, x, B, D, B_p):
        if D == self.in_p and B == B_p:
            return x   # lane/tile aligned: stream directly, cast inside the kernel
        cdt = self.compute_dtype
        return jnp.zeros((B_p, self.in_p), cdt).at[:B, :D].set(x.astype(cdt))

    # ---------------------------------------------------------------- forward
    def __call__(self, x):
        B, D = x.shape
        assert D == self.in_dim
        out_dtype = self.out_dtype if self.out_dtype is not None else x.dtype
        cdt = self.compute_dtype
        sub = _sublane(cdt)
        C_p = self.outs_p[-1]

        bt = self.batch_tile if self.batch_tile is not None \
            else self._default_batch_tile(B, sub)
        bt = _round_up(bt, sub)

        x_item = x.dtype.itemsize if D == self.in_p else cdt.itemsize
        out_item = jnp.dtype(out_dtype).itemsize

        if self._estimate(sub, x_item, out_item) <= self.vmem_budget:
            # ---------------- fused path: all weights resident in VMEM ----------
            while self._estimate(bt, x_item, out_item) > self.vmem_budget:
                bt = max(sub, _round_up(bt // 2, sub))
            B_p = _round_up(B, bt)
            x_in = self._maybe_pad_x(x, B, D, B_p)

            est = self._estimate(bt, x_in.dtype.itemsize, out_item)
            vmem_limit = int(min(max(2 * est, 32 << 20), self.vmem_budget))

            params = []
            for wp, bp in zip(self.w_pad, self.b_pad):
                params += [wp, bp]

            in_specs = [pl.BlockSpec((bt, self.in_p), lambda i: (i, 0))]
            for p in params:
                # Grid-invariant blocks: single buffer (no 2x VMEM for weights).
                in_specs.append(pl.BlockSpec(p.shape, lambda i: (0, 0),
                                             pipeline_mode=pl.Buffered(1)))
            out_spec = pl.BlockSpec((bt, C_p), lambda i: (i, 0))

            flops = 2 * B_p * sum(ip * op
                                  for ip, op in zip(self.ins_p, self.outs_p))
            bytes_accessed = (B_p * self.in_p * x_in.dtype.itemsize
                              + self._param_bytes + B_p * C_p * out_item)

            out_p = pl.pallas_call(
                functools.partial(_fused_mlp_kernel, self.num_layers),
                out_shape=jax.ShapeDtypeStruct((B_p, C_p), out_dtype),
                grid_spec=pltpu.PrefetchScalarGridSpec(
                    num_scalar_prefetch=0,
                    grid=(B_p // bt,),
                    in_specs=in_specs,
                    out_specs=out_spec,
                ),
                compiler_params=pltpu.CompilerParams(
                    dimension_semantics=("parallel",),
                    vmem_limit_bytes=vmem_limit,
                ),
                cost_estimate=pl.CostEstimate(flops=flops, transcendentals=0,
                                              bytes_accessed=bytes_accessed),
            )(x_in, *params)
        else:
            # ------------- fallback: per-layer K/N-tiled linear kernels ---------
            # Resident weights would exceed the VMEM budget (e.g. very wide hidden
            # layers on v7x's 64 MiB/TC); intermediate activations round-trip HBM
            # in the compute dtype but the kernel stays MXU-bound and usable.
            B_p = _round_up(B, bt)
            x_in = self._maybe_pad_x(x, B, D, B_p)
            vmem_limit = max(self.vmem_budget, 32 << 20)
            h = x_in.astype(cdt)
            for li in range(self.num_layers):
                is_last = li == self.num_layers - 1
                relu = 0 < li < self.num_layers - 1
                layer_out_dtype = out_dtype if is_last else cdt
                h = _tiled_linear(h, self.w_pad[li], self.b_pad[li],
                                  apply_relu=relu, out_dtype=layer_out_dtype,
                                  tm=bt, vmem_limit=vmem_limit)
            out_p = h

        return out_p[:B, :self.out_dim]


def mlp_forward(x, weights, biases, *, compute_dtype=jnp.bfloat16, out_dtype=None,
                batch_tile=None):
    """One-shot convenience wrapper (pads params per call; prefer PallasMLP)."""
    return PallasMLP(weights, biases, compute_dtype=compute_dtype,
                     out_dtype=out_dtype, batch_tile=batch_tile)(x)


# --------------------------------------------------------------------------- #
# Parameter construction + references
# --------------------------------------------------------------------------- #
def make_mlp_params(input_size, hidden_size, num_classes, hidden_count, key):
    """Deterministic parameter construction mirroring MLP.__init__.

    Weights -> torch.nn.init.ones_ (all ones), stored as [in, out].
    Biases  -> deterministic small values from the provided key (the reference module
               leaves biases at PyTorch's default init; any deterministic choice works
               for this synthetic kernel).
    """
    sizes = [input_size] + [hidden_size] * hidden_count + [num_classes]
    weights, biases = [], []
    for li in range(len(sizes) - 1):
        fan_in, fan_out = sizes[li], sizes[li + 1]
        weights.append(jnp.ones((fan_in, fan_out), dtype=jnp.float32))
        key, sub = jax.random.split(key)
        biases.append(0.01 * jax.random.normal(sub, (fan_out,), dtype=jnp.float32))
    return weights, biases


def mlp_reference(x, weights, biases):
    """Pure-JAX f32 reference reproducing MLP.forward exactly."""
    h = x @ weights[0] + biases[0]
    num_layers = len(weights)
    if num_layers > 2:
        for i in range(1, num_layers - 1):
            h = h @ weights[i] + biases[i]
            h = jnp.maximum(h, 0.0)
    return h @ weights[-1] + biases[-1]


def mlp_reference_cast(x, weights, biases, dt):
    """Reference applying the same per-layer casts as the bf16 kernel path."""
    h = x
    num_layers = len(weights)
    for i, (w, b) in enumerate(zip(weights, biases)):
        h = jnp.dot(h.astype(dt), w.astype(dt),
                    preferred_element_type=jnp.float32) + b
        if 0 < i < num_layers - 1:
            h = jnp.maximum(h, 0.0)
    return h


if __name__ == "__main__":
    # Small shapes consistent with the module's forward: x is [B, input_size].
    B, INPUT_SIZE, HIDDEN_SIZE, NUM_CLASSES = 8, 32, 32, 16
    HIDDEN_COUNT = 2  # -> 3 linear layers, exercising the middle-layer ReLU path

    key = jax.random.PRNGKey(0)
    key, xkey = jax.random.split(key)
    x = jax.random.normal(xkey, (B, INPUT_SIZE), dtype=jnp.float32)

    weights, biases = make_mlp_params(
        INPUT_SIZE, HIDDEN_SIZE, NUM_CLASSES, HIDDEN_COUNT, key
    )
    ref = mlp_reference(x, weights, biases)

    # ---- exact f32 compute path: must match the pure-JAX reference (padding exact)
    mlp_f32 = PallasMLP(weights, biases, compute_dtype=jnp.float32)
    out_f32 = jax.block_until_ready(mlp_f32(x))
    assert out_f32.shape == (B, NUM_CLASSES), out_f32.shape
    assert jnp.allclose(out_f32, ref, rtol=1e-5, atol=1e-4), "f32 path mismatch"

    # ---- default bf16-input / f32-accumulate fast path.  Expected ~1e-2 relative
    #      agreement with a reference applying the same casts (rounding compounds
    #      with depth; keep first/last layers in f32 if tighter accuracy is needed).
    mlp_bf16 = PallasMLP(weights, biases)  # compute_dtype defaults to bf16
    out_bf16 = jax.block_until_ready(mlp_bf16(x))
    ref_bf16 = mlp_reference_cast(x, weights, biases, jnp.bfloat16)
    assert out_bf16.shape == (B, NUM_CLASSES)
    assert bool(jnp.isfinite(out_bf16).all())
    assert jnp.allclose(out_bf16, ref_bf16, rtol=2e-2, atol=2e-1), "bf16 path off"

    # ---- exercise the K/N-tiled per-layer fallback (taken when resident weights
    #      would exceed the VMEM budget, e.g. very wide layers on v7x's 64 MiB/TC)
    mlp_fb = PallasMLP(weights, biases, compute_dtype=jnp.float32)
    mlp_fb.vmem_budget = 0  # force the fallback path for testing
    out_fb = jax.block_until_ready(mlp_fb(x))
    assert out_fb.shape == (B, NUM_CLASSES)
    assert jnp.allclose(out_fb, ref, rtol=1e-5, atol=1e-4), "fallback path off"

    print("KERNEL_OK")
</pallas_src>

<mosaic_0001>
module attributes {stable_mosaic.version = 11 : i64} {
  func.func @_fused_mlp_kernel(%arg0: i32, %arg1: memref<8x128xf32, #tpu.memory_space<vmem>>, %arg2: memref<128x128xf32, #tpu.memory_space<vmem>>, %arg3: memref<1x128xf32, #tpu.memory_space<vmem>>, %arg4: memref<128x128xf32, #tpu.memory_space<vmem>>, %arg5: memref<1x128xf32, #tpu.memory_space<vmem>>, %arg6: memref<128x128xf32, #tpu.memory_space<vmem>>, %arg7: memref<1x128xf32, #tpu.memory_space<vmem>>, %arg8: memref<8x128xf32, #tpu.memory_space<vmem>>) attributes {dimension_semantics = [#tpu.dimension_semantics<parallel>], iteration_bounds = array<i64: 1>, scalar_prefetch = 0 : i64, scratch_operands = 0 : i64, tpu.core_type = #tpu.core_type<tc>, window_params = [{transform_indices = @transform_0, window_bounds = array<i64: 8, 128>}, {pipeline_mode = #tpu.pipeline_mode<synchronous>, transform_indices = @transform_1, window_bounds = array<i64: 128, 128>}, {pipeline_mode = #tpu.pipeline_mode<synchronous>, transform_indices = @transform_2, window_bounds = array<i64: 1, 128>}, {pipeline_mode = #tpu.pipeline_mode<synchronous>, transform_indices = @transform_3, window_bounds = array<i64: 128, 128>}, {pipeline_mode = #tpu.pipeline_mode<synchronous>, transform_indices = @transform_4, window_bounds = array<i64: 1, 128>}, {pipeline_mode = #tpu.pipeline_mode<synchronous>, transform_indices = @transform_5, window_bounds = array<i64: 128, 128>}, {pipeline_mode = #tpu.pipeline_mode<synchronous>, transform_indices = @transform_6, window_bounds = array<i64: 1, 128>}, {transform_indices = @transform_7, window_bounds = array<i64: 8, 128>}]} {
    %c0 = arith.constant 0 : index
    %c0_0 = arith.constant 0 : index
    %0 = vector.load %arg1[%c0, %c0_0] : memref<8x128xf32, #tpu.memory_space<vmem>>, vector<8x128xf32>
    %c0_1 = arith.constant 0 : index
    %c0_2 = arith.constant 0 : index
    %1 = vector.load %arg2[%c0_1, %c0_2] : memref<128x128xf32, #tpu.memory_space<vmem>>, vector<128x128xf32>
    %c0_3 = arith.constant 0 : index
    %c0_4 = arith.constant 0 : index
    %2 = vector.load %arg3[%c0_3, %c0_4] : memref<1x128xf32, #tpu.memory_space<vmem>>, vector<1x128xf32>
    %cst = arith.constant dense<0.000000e+00> : vector<8x128xf32>
    %3 = tpu.matmul %0, %1, %cst {dimension_numbers = #tpu.dot_dimension_numbers<[1], [0], [0], [1], [0, 0, 1, 1], [], []>} : vector<8x128xf32>, vector<128x128xf32>, vector<8x128xf32> -> vector<8x128xf32>
    %4 = vector.broadcast %2 : vector<1x128xf32> to vector<8x128xf32>
    %5 = arith.addf %3, %4 : vector<8x128xf32>
    %c0_5 = arith.constant 0 : index
    %c0_6 = arith.constant 0 : index
    %6 = vector.load %arg4[%c0_5, %c0_6] : memref<128x128xf32, #tpu.memory_space<vmem>>, vector<128x128xf32>
    %c0_7 = arith.constant 0 : index
    %c0_8 = arith.constant 0 : index
    %7 = vector.load %arg5[%c0_7, %c0_8] : memref<1x128xf32, #tpu.memory_space<vmem>>, vector<1x128xf32>
    %cst_9 = arith.constant dense<0.000000e+00> : vector<8x128xf32>
    %8 = tpu.matmul %5, %6, %cst_9 {dimension_numbers = #tpu.dot_dimension_numbers<[1], [0], [0], [1], [0, 0, 1, 1], [], []>} : vector<8x128xf32>, vector<128x128xf32>, vector<8x128xf32> -> vector<8x128xf32>
    %9 = vector.broadcast %7 : vector<1x128xf32> to vector<8x128xf32>
    %10 = arith.addf %8, %9 : vector<8x128xf32>
    %cst_10 = arith.constant 0.000000e+00 : f32
    %11 = vector.broadcast %cst_10 : f32 to vector<8x128xf32>
    %12 = arith.maximumf %10, %11 : vector<8x128xf32>
    %c0_11 = arith.constant 0 : index
    %c0_12 = arith.constant 0 : index
    %13 = vector.load %arg6[%c0_11, %c0_12] : memref<128x128xf32, #tpu.memory_space<vmem>>, vector<128x128xf32>
    %c0_13 = arith.constant 0 : index
    %c0_14 = arith.constant 0 : index
    %14 = vector.load %arg7[%c0_13, %c0_14] : memref<1x128xf32, #tpu.memory_space<vmem>>, vector<1x128xf32>
    %cst_15 = arith.constant dense<0.000000e+00> : vector<8x128xf32>
    %15 = tpu.matmul %12, %13, %cst_15 {dimension_numbers = #tpu.dot_dimension_numbers<[1], [0], [0], [1], [0, 0, 1, 1], [], []>} : vector<8x128xf32>, vector<128x128xf32>, vector<8x128xf32> -> vector<8x128xf32>
    %16 = vector.broadcast %14 : vector<1x128xf32> to vector<8x128xf32>
    %17 = arith.addf %15, %16 : vector<8x128xf32>
    %c0_16 = arith.constant 0 : index
    %c0_17 = arith.constant 0 : index
    %18 = vector.load %arg8[%c0_16, %c0_17] : memref<8x128xf32, #tpu.memory_space<vmem>>, vector<8x128xf32>
    tpu.vector_store %arg8[%c0_16, %c0_17], %17 {strides = array<i32>} : memref<8x128xf32, #tpu.memory_space<vmem>>, vector<8x128xf32>,
    return
  }
  func.func @transform_0(%arg0: i32) -> (i32, i32) {
    %c0_i32 = arith.constant 0 : i32
    %c0_i32_0 = arith.constant 0 : i32
    return %arg0, %c0_i32 : i32, i32
  }
  func.func @transform_1(%arg0: i32) -> (i32, i32) {
    %c0_i32 = arith.constant 0 : i32
    %c0_i32_0 = arith.constant 0 : i32
    %c0_i32_1 = arith.constant 0 : i32
    return %c0_i32, %c0_i32_0 : i32, i32
  }
  func.func @transform_2(%arg0: i32) -> (i32, i32) {
    %c0_i32 = arith.constant 0 : i32
    %c0_i32_0 = arith.constant 0 : i32
    %c0_i32_1 = arith.constant 0 : i32
    return %c0_i32, %c0_i32_0 : i32, i32
  }
  func.func @transform_3(%arg0: i32) -> (i32, i32) {
    %c0_i32 = arith.constant 0 : i32
    %c0_i32_0 = arith.constant 0 : i32
    %c0_i32_1 = arith.constant 0 : i32
    return %c0_i32, %c0_i32_0 : i32, i32
  }
  func.func @transform_4(%arg0: i32) -> (i32, i32) {
    %c0_i32 = arith.constant 0 : i32
    %c0_i32_0 = arith.constant 0 : i32
    %c0_i32_1 = arith.constant 0 : i32
    return %c0_i32, %c0_i32_0 : i32, i32
  }
  func.func @transform_5(%arg0: i32) -> (i32, i32) {
    %c0_i32 = arith.constant 0 : i32
    %c0_i32_0 = arith.constant 0 : i32
    %c0_i32_1 = arith.constant 0 : i32
    return %c0_i32, %c0_i32_0 : i32, i32
  }
  func.func @transform_6(%arg0: i32) -> (i32, i32) {
    %c0_i32 = arith.constant 0 : i32
    %c0_i32_0 = arith.constant 0 : i32
    %c0_i32_1 = arith.constant 0 : i32
    return %c0_i32, %c0_i32_0 : i32, i32
  }
  func.func @transform_7(%arg0: i32) -> (i32, i32) {
    %c0_i32 = arith.constant 0 : i32
    %c0_i32_0 = arith.constant 0 : i32
    return %arg0, %c0_i32 : i32, i32
  }
}

</mosaic_0001>

<llo_original>
// kernel: tpu_custom_call.1
$region0: #{tpu_custom_call.1}
  #allocation0 [shape = 'u32[]', space=smem, size = 0x4, offset = 0x4, fixed_abs, tag = 'smem constant byte address 0x4 - core index']
  #allocation1 [shape = 'u32[144,128]{1,0:T(1,128)}', space=vmem, size = 0x12000, scoped, tag = 'internal scratch']
  %s0 = inlined_call_operand.hbm [shape: f32[8,128], index: 0, kind: input, shape index: {}]
  %s1 = inlined_call_operand.hbm [shape: f32[128,128], index: 1, kind: input, shape index: {}]
  %s2 = inlined_call_operand.vmem [shape: f32[1,128], index: 2, kind: input, shape index: {}]
  %s3 = inlined_call_operand.hbm [shape: f32[128,128], index: 3, kind: input, shape index: {}]
  %s4 = inlined_call_operand.vmem [shape: f32[1,128], index: 4, kind: input, shape index: {}]
  %s5 = inlined_call_operand.hbm [shape: f32[128,128], index: 5, kind: input, shape index: {}]
  %s6 = inlined_call_operand.vmem [shape: f32[1,128], index: 6, kind: input, shape index: {}]
  %s7 = inlined_call_operand.hbm [shape: f32[8,128], index: 7, kind: output, shape index: {}]
  %s8 = sld [smem:[#allocation0]]
  $region54: #{tpu_custom_call.1} parent=0
    _
  %s10 = ssub.s32 1, %s8
  %s11 = scalar_select 0, %s10, %s8
  $region1: #{tpu_custom_call.1} parent=0
    #allocation2 [shape = 'u8[4096]{0}', space=vmem, size = 0x1000, scoped, tag = 'input window, operand 0, single buffered']
    #allocation3 [shape = 's32[1]{0}', space=sflag, size = 0x4, scoped, tag = 'scoped memory for tpu_custom_call.1']
    #allocation4 [shape = 's32[1]{0}', space=sflag, size = 0x4, scoped, tag = 'scoped memory for tpu_custom_call.1']
    #allocation5 [shape = 'u8[65536]{0}', space=vmem, size = 0x10000, scoped, tag = 'input window, operand 1, single buffered']
    #allocation6 [shape = 's32[1]{0}', space=sflag, size = 0x4, scoped, tag = 'scoped memory for tpu_custom_call.1']
    #allocation7 [shape = 'u8[65536]{0}', space=vmem, size = 0x10000, scoped, tag = 'input window, operand 3, single buffered']
    #allocation8 [shape = 'u8[65536]{0}', space=vmem, size = 0x10000, scoped, tag = 'input window, operand 5, single buffered']
    #allocation9 [shape = 's32[1]{0}', space=sflag, size = 0x4, scoped, tag = 'scoped memory for tpu_custom_call.1']
    #allocation10 [shape = 'u8[4096]{0}', space=vmem, size = 0x1000, scoped, tag = 'output window, operand 0, single buffered']
    %12 = vsyncpa [#allocation3], 0
    %13 = vsyncpa [#allocation6], 0
    %14 = vsyncpa [#allocation9], 0
    %15 = vsyncpa [#allocation4], 0
    // Predicated region
    $region2: #{tpu_custom_call.1} parent=1 // pred_check
      _
    $region3: #{tpu_custom_call.1} parent=1 // pred_check_branch
      %17 = sbr.rel (0) target = $region5
    $region4: #{tpu_custom_call.1} parent=1 // pred_region
      %s19 = ssub.s32 128, 128
      %20 = vsyncadd [#allocation3], %s19
      %s22 = sshll.u32 [#allocation2], 4
      %s23 = int_to_ptr.vmem [resolvable:$true] %s22
      %25 = dma.hbm_to_vmem [thread:$0]  %s0, 128, %s23, [#allocation3]
    $region5: #{tpu_custom_call.1} parent=1 // pred_fallthru
      _
    // Predicated region
    $region6: #{tpu_custom_call.1} parent=1 // pred_check
      _
    $region7: #{tpu_custom_call.1} parent=1 // pred_check_branch
      %27 = sbr.rel (0) target = $region9
    $region8: #{tpu_custom_call.1} parent=1 // pred_region
      %s29 = ssub.s32 2048, 2048
      %30 = vsyncadd [#allocation6], %s29
      %s31 = sshll.u32 [#allocation5], 4
      %s32 = int_to_ptr.vmem [resolvable:$true] %s31
      %37 = dma.hbm_to_vmem [thread:$0]  %s1, 2048, %s32, [#allocation6], 128, 128, 8
    $region9: #{tpu_custom_call.1} parent=1 // pred_fallthru
      _
    // Predicated region
    $region10: #{tpu_custom_call.1} parent=1 // pred_check
      _
    $region11: #{tpu_custom_call.1} parent=1 // pred_check_branch
      %39 = sbr.rel (0) target = $region13
    $region12: #{tpu_custom_call.1} parent=1 // pred_region
      _
    $region13: #{tpu_custom_call.1} parent=1 // pred_fallthru
      _
    // Predicated region
    $region14: #{tpu_custom_call.1} parent=1 // pred_check
      _
    $region15: #{tpu_custom_call.1} parent=1 // pred_check_branch
      %41 = sbr.rel (0) target = $region17
    $region16: #{tpu_custom_call.1} parent=1 // pred_region
      %s43 = ssub.s32 2048, 2048
      %44 = vsyncadd [#allocation6], %s43
      %s45 = sshll.u32 [#allocation7], 4
      %s46 = int_to_ptr.vmem [resolvable:$true] %s45
      %51 = dma.hbm_to_vmem [thread:$0]  %s3, 2048, %s46, [#allocation6], 128, 128, 8
    $region17: #{tpu_custom_call.1} parent=1 // pred_fallthru
      _
    // Predicated region
    $region18: #{tpu_custom_call.1} parent=1 // pred_check
      _
    $region19: #{tpu_custom_call.1} parent=1 // pred_check_branch
      %53 = sbr.rel (0) target = $region21
    $region20: #{tpu_custom_call.1} parent=1 // pred_region
      _
    $region21: #{tpu_custom_call.1} parent=1 // pred_fallthru
      _
    // Predicated region
    $region22: #{tpu_custom_call.1} parent=1 // pred_check
      _
    $region23: #{tpu_custom_call.1} parent=1 // pred_check_branch
      %55 = sbr.rel (0) target = $region25
    $region24: #{tpu_custom_call.1} parent=1 // pred_region
      %s57 = ssub.s32 2048, 2048
      %58 = vsyncadd [#allocation9], %s57
      %s59 = sshll.u32 [#allocation8], 4
      %s60 = int_to_ptr.vmem [resolvable:$true] %s59
      %65 = dma.hbm_to_vmem [thread:$0]  %s5, 2048, %s60, [#allocation9], 128, 128, 8
    $region25: #{tpu_custom_call.1} parent=1 // pred_fallthru
      _
    // Predicated region
    $region26: #{tpu_custom_call.1} parent=1 // pred_check
      _
    $region27: #{tpu_custom_call.1} parent=1 // pred_check_branch
      %67 = sbr.rel (0) target = $region29
    $region28: #{tpu_custom_call.1} parent=1 // pred_region
      _
    $region29: #{tpu_custom_call.1} parent=1 // pred_fallthru
      _
    // Predicated region
    $region30: #{tpu_custom_call.1} parent=1 // pred_check
      _
    $region31: #{tpu_custom_call.1} parent=1 // pred_check_branch
      %69 = sbr.rel (0) target = $region33
    $region32: #{tpu_custom_call.1} parent=1 // pred_region
      %70 = dma.done [#allocation3], 128
    $region33: #{tpu_custom_call.1} parent=1 // pred_fallthru
      _
    // Predicated region
    $region34: #{tpu_custom_call.1} parent=1 // pred_check
      _
    $region35: #{tpu_custom_call.1} parent=1 // pred_check_branch
      %72 = sbr.rel (0) target = $region37
    $region36: #{tpu_custom_call.1} parent=1 // pred_region
      %73 = dma.done [#allocation6], 2048
    $region37: #{tpu_custom_call.1} parent=1 // pred_fallthru
      _
    // Predicated region
    $region38: #{tpu_custom_call.1} parent=1 // pred_check
      _
    $region39: #{tpu_custom_call.1} parent=1 // pred_check_branch
      %75 = sbr.rel (0) target = $region41
    $region40: #{tpu_custom_call.1} parent=1 // pred_region
      %76 = dma.done [#allocation6], 2048
    $region41: #{tpu_custom_call.1} parent=1 // pred_fallthru
      _
    // Predicated region
    $region42: #{tpu_custom_call.1} parent=1 // pred_check
      _
    $region43: #{tpu_custom_call.1} parent=1 // pred_check_branch
      %78 = sbr.rel (0) target = $region45
    $region44: #{tpu_custom_call.1} parent=1 // pred_region
      %79 = dma.done [#allocation9], 2048
    $region45: #{tpu_custom_call.1} parent=1 // pred_fallthru
      _
    %v80 = vld [vmem:[#allocation2] sm:$0xff]
    %v81 = vld [vmem:[#allocation5] sm:$0xff]
    %v82 = vld [vmem:[#allocation5 + $0x8] sm:$0xff]
    %v83 = vld [vmem:[#allocation5 + $0x10] sm:$0xff]
    %v84 = vld [vmem:[#allocation5 + $0x18] sm:$0xff]
    %v85 = vld [vmem:[#allocation5 + $0x20] sm:$0xff]
    %v86 = vld [vmem:[#allocation5 + $0x28] sm:$0xff]
    %v87 = vld [vmem:[#allocation5 + $0x30] sm:$0xff]
    %v88 = vld [vmem:[#allocation5 + $0x38] sm:$0xff]
    %v89 = vld [vmem:[#allocation5 + $0x40] sm:$0xff]
    %v90 = vld [vmem:[#allocation5 + $0x48] sm:$0xff]
    %v91 = vld [vmem:[#allocation5 + $0x50] sm:$0xff]
    %v92 = vld [vmem:[#allocation5 + $0x58] sm:$0xff]
    %v93 = vld [vmem:[#allocation5 + $0x60] sm:$0xff]
    %v94 = vld [vmem:[#allocation5 + $0x68] sm:$0xff]
    %v95 = vld [vmem:[#allocation5 + $0x70] sm:$0xff]
    %v96 = vld [vmem:[#allocation5 + $0x78] sm:$0xff]
    %v97 = vld [vmem:[%s2] sm:$0x1]
    %v99 = vlaneseq
    %v100 = vshrl.u32 %v99, 7
    %v101 = vsub.s32 0, %v100
    %v102 = vrot.slane %v97, %v101
    %104 = vmatprep.subr.mxu0 0.0
    %105 = vmatpush1.msra.mxu0 %v96
    %106 = vmatprep.subr.mxu0 0.0
    %107 = vmatpush1.msra.mxu0 %v95
    %108 = vmatprep.subr.mxu0 0.0
    %109 = vmatpush1.msra.mxu0 %v94
    %110 = vmatprep.subr.mxu0 0.0
    %111 = vmatpush1.msra.mxu0 %v93
    %112 = vmatprep.subr.mxu0 0.0
    %113 = vmatpush1.msra.mxu0 %v92
    %114 = vmatprep.subr.mxu0 0.0
    %115 = vmatpush1.msra.mxu0 %v91
    %116 = vmatprep.subr.mxu0 0.0
    %117 = vmatpush1.msra.mxu0 %v90
    %118 = vmatprep.subr.mxu0 0.0
    %119 = vmatpush1.msra.mxu0 %v89
    %120 = vmatprep.subr.mxu0 0.0
    %121 = vmatpush1.msra.mxu0 %v88
    %122 = vmatprep.subr.mxu0 0.0
    %123 = vmatpush1.msra.mxu0 %v87
    %124 = vmatprep.subr.mxu0 0.0
    %125 = vmatpush1.msra.mxu0 %v86
    %126 = vmatprep.subr.mxu0 0.0
    %127 = vmatpush1.msra.mxu0 %v85
    %128 = vmatprep.subr.mxu0 0.0
    %129 = vmatpush1.msra.mxu0 %v84
    %130 = vmatprep.subr.mxu0 0.0
    %131 = vmatpush1.msra.mxu0 %v83
    %132 = vmatprep.subr.mxu0 0.0
    %133 = vmatpush1.msra.mxu0 %v82
    %134 = vmatprep.subr.mxu0 0.0
    %135 = vmatpush1.msra.mxu0 %v81
    %136 = vmatprep.subr.mxu0 0.0
    %137 = vmatpush2.msra.mxu0 0.0
    %138 = vmatprep.subr.mxu0 0.0
    %139 = vmatpush2.msra.mxu0 0.0
    %140 = vmatprep.subr.mxu0 0.0
    %141 = vmatpush2.msra.mxu0 0.0
    %142 = vmatprep.subr.mxu0 0.0
    %143 = vmatpush2.msra.mxu0 0.0
    %144 = vmatprep.subr.mxu0 0.0
    %145 = vmatpush2.msra.mxu0 0.0
    %146 = vmatprep.subr.mxu0 0.0
    %147 = vmatpush2.msra.mxu0 0.0
    %148 = vmatprep.subr.mxu0 0.0
    %149 = vmatpush2.msra.mxu0 0.0
    %150 = vmatprep.subr.mxu0 0.0
    %151 = vmatpush2.msra.mxu0 0.0
    %152 = vmatprep.subr.mxu0 0.0
    %153 = vmatpush2.msra.mxu0 0.0
    %154 = vmatprep.subr.mxu0 0.0
    %155 = vmatpush2.msra.mxu0 0.0
    %156 = vmatprep.subr.mxu0 0.0
    %157 = vmatpush2.msra.mxu0 0.0
    %158 = vmatprep.subr.mxu0 0.0
    %159 = vmatpush2.msra.mxu0 0.0
    %160 = vmatprep.subr.mxu0 0.0
    %161 = vmatpush2.msra.mxu0 0.0
    %162 = vmatprep.subr.mxu0 0.0
    %163 = vmatpush2.msra.mxu0 0.0
    %164 = vmatprep.subr.mxu0 0.0
    %165 = vmatpush2.msra.mxu0 0.0
    %166 = vmatprep.subr.mxu0 0.0
    %167 = vmatpush2.msra.mxu0 0.0
    %168 = vmatprep.mubr.f32.mxu0 0.0
    %169 = vmatmul.mubr.f32.gmra.mxu0 %v80
    %v170 = vpop.f32.mrf.mxu0
    %v171 = vadd.f32 %v102, %v170
    %v172 = vpop.f32.mrf.mxu0
    %173 = vdwg.mxu0
    %v174 = vld [vmem:[#allocation7] sm:$0xff]
    %v175 = vld [vmem:[#allocation7 + $0x8] sm:$0xff]
    %v176 = vld [vmem:[#allocation7 + $0x10] sm:$0xff]
    %v177 = vld [vmem:[#allocation7 + $0x18] sm:$0xff]
    %v178 = vld [vmem:[#allocation7 + $0x20] sm:$0xff]
    %v179 = vld [vmem:[#allocation7 + $0x28] sm:$0xff]
    %v180 = vld [vmem:[#allocation7 + $0x30] sm:$0xff]
    %v181 = vld [vmem:[#allocation7 + $0x38] sm:$0xff]
    %v182 = vld [vmem:[#allocation7 + $0x40] sm:$0xff]
    %v183 = vld [vmem:[#allocation7 + $0x48] sm:$0xff]
    %v184 = vld [vmem:[#allocation7 + $0x50] sm:$0xff]
    %v185 = vld [vmem:[#allocation7 + $0x58] sm:$0xff]
    %v186 = vld [vmem:[#allocation7 + $0x60] sm:$0xff]
    %v187 = vld [vmem:[#allocation7 + $0x68] sm:$0xff]
    %v188 = vld [vmem:[#allocation7 + $0x70] sm:$0xff]
    %v189 = vld [vmem:[#allocation7 + $0x78] sm:$0xff]
    %v190 = vld [vmem:[%s4] sm:$0x1]
    %v192 = vlaneseq
    %v193 = vshrl.u32 %v192, 7
    %v194 = vsub.s32 0, %v193
    %v195 = vrot.slane %v190, %v194
    %197 = vmatprep.subr.mxu0 0.0
    %198 = vmatpush1.msra.mxu0 %v189
    %199 = vmatprep.subr.mxu0 0.0
    %200 = vmatpush1.msra.mxu0 %v188
    %201 = vmatprep.subr.mxu0 0.0
    %202 = vmatpush1.msra.mxu0 %v187
    %203 = vmatprep.subr.mxu0 0.0
    %204 = vmatpush1.msra.mxu0 %v186
    %205 = vmatprep.subr.mxu0 0.0
    %206 = vmatpush1.msra.mxu0 %v185
    %207 = vmatprep.subr.mxu0 0.0
    %208 = vmatpush1.msra.mxu0 %v184
    %209 = vmatprep.subr.mxu0 0.0
    %210 = vmatpush1.msra.mxu0 %v183
    %211 = vmatprep.subr.mxu0 0.0
    %212 = vmatpush1.msra.mxu0 %v182
    %213 = vmatprep.subr.mxu0 0.0
    %214 = vmatpush1.msra.mxu0 %v181
    %215 = vmatprep.subr.mxu0 0.0
    %216 = vmatpush1.msra.mxu0 %v180
    %217 = vmatprep.subr.mxu0 0.0
    %218 = vmatpush1.msra.mxu0 %v179
    %219 = vmatprep.subr.mxu0 0.0
    %220 = vmatpush1.msra.mxu0 %v178
    %221 = vmatprep.subr.mxu0 0.0
    %222 = vmatpush1.msra.mxu0 %v177
    %223 = vmatprep.subr.mxu0 0.0
    %224 = vmatpush1.msra.mxu0 %v176
    %225 = vmatprep.subr.mxu0 0.0
    %226 = vmatpush1.msra.mxu0 %v175
    %227 = vmatprep.subr.mxu0 0.0
    %228 = vmatpush1.msra.mxu0 %v174
    %229 = vmatprep.subr.mxu0 0.0
    %230 = vmatpush2.msra.mxu0 0.0
    %231 = vmatprep.subr.mxu0 0.0
    %232 = vmatpush2.msra.mxu0 0.0
    %233 = vmatprep.subr.mxu0 0.0
    %234 = vmatpush2.msra.mxu0 0.0
    %235 = vmatprep.subr.mxu0 0.0
    %236 = vmatpush2.msra.mxu0 0.0
    %237 = vmatprep.subr.mxu0 0.0
    %238 = vmatpush2.msra.mxu0 0.0
    %239 = vmatprep.subr.mxu0 0.0
    %240 = vmatpush2.msra.mxu0 0.0
    %241 = vmatprep.subr.mxu0 0.0
    %242 = vmatpush2.msra.mxu0 0.0
    %243 = vmatprep.subr.mxu0 0.0
    %244 = vmatpush2.msra.mxu0 0.0
    %245 = vmatprep.subr.mxu0 0.0
    %246 = vmatpush2.msra.mxu0 0.0
    %247 = vmatprep.subr.mxu0 0.0
    %248 = vmatpush2.msra.mxu0 0.0
    %249 = vmatprep.subr.mxu0 0.0
    %250 = vmatpush2.msra.mxu0 0.0
    %251 = vmatprep.subr.mxu0 0.0
    %252 = vmatpush2.msra.mxu0 0.0
    %253 = vmatprep.subr.mxu0 0.0
    %254 = vmatpush2.msra.mxu0 0.0
    %255 = vmatprep.subr.mxu0 0.0
    %256 = vmatpush2.msra.mxu0 0.0
    %257 = vmatprep.subr.mxu0 0.0
    %258 = vmatpush2.msra.mxu0 0.0
    %259 = vmatprep.subr.mxu0 0.0
    %260 = vmatpush2.msra.mxu0 0.0
    %261 = vmatprep.mubr.f32.mxu0 0.0
    %262 = vmatmul.mubr.f32.gmra.mxu0 %v171
    %v263 = vpop.f32.mrf.mxu0
    %v264 = vadd.f32 %v195, %v263
    %v265 = vpop.f32.mrf.mxu0
    %266 = vdwg.mxu0
    %v267 = vmax.f32 %v264, 0.0
    %v268 = vld [vmem:[#allocation8] sm:$0xff]
    %v269 = vld [vmem:[#allocation8 + $0x8] sm:$0xff]
    %v270 = vld [vmem:[#allocation8 + $0x10] sm:$0xff]
    %v271 = vld [vmem:[#allocation8 + $0x18] sm:$0xff]
    %v272 = vld [vmem:[#allocation8 + $0x20] sm:$0xff]
    %v273 = vld [vmem:[#allocation8 + $0x28] sm:$0xff]
    %v274 = vld [vmem:[#allocation8 + $0x30] sm:$0xff]
    %v275 = vld [vmem:[#allocation8 + $0x38] sm:$0xff]
    %v276 = vld [vmem:[#allocation8 + $0x40] sm:$0xff]
    %v277 = vld [vmem:[#allocation8 + $0x48] sm:$0xff]
    %v278 = vld [vmem:[#allocation8 + $0x50] sm:$0xff]
    %v279 = vld [vmem:[#allocation8 + $0x58] sm:$0xff]
    %v280 = vld [vmem:[#allocation8 + $0x60] sm:$0xff]
    %v281 = vld [vmem:[#allocation8 + $0x68] sm:$0xff]
    %v282 = vld [vmem:[#allocation8 + $0x70] sm:$0xff]
    %v283 = vld [vmem:[#allocation8 + $0x78] sm:$0xff]
    %v284 = vld [vmem:[%s6] sm:$0x1]
    %v286 = vlaneseq
    %v287 = vshrl.u32 %v286, 7
    %v288 = vsub.s32 0, %v287
    %v289 = vrot.slane %v284, %v288
    %291 = vmatprep.subr.mxu0 0.0
    %292 = vmatpush1.msra.mxu0 %v283
    %293 = vmatprep.subr.mxu0 0.0
    %294 = vmatpush1.msra.mxu0 %v282
    %295 = vmatprep.subr.mxu0 0.0
    %296 = vmatpush1.msra.mxu0 %v281
    %297 = vmatprep.subr.mxu0 0.0
    %298 = vmatpush1.msra.mxu0 %v280
    %299 = vmatprep.subr.mxu0 0.0
    %300 = vmatpush1.msra.mxu0 %v279
    %301 = vmatprep.subr.mxu0 0.0
    %302 = vmatpush1.msra.mxu0 %v278
    %303 = vmatprep.subr.mxu0 0.0
    %304 = vmatpush1.msra.mxu0 %v277
    %305 = vmatprep.subr.mxu0 0.0
    %306 = vmatpush1.msra.mxu0 %v276
    %307 = vmatprep.subr.mxu0 0.0
    %308 = vmatpush1.msra.mxu0 %v275
    %309 = vmatprep.subr.mxu0 0.0
    %310 = vmatpush1.msra.mxu0 %v274
    %311 = vmatprep.subr.mxu0 0.0
    %312 = vmatpush1.msra.mxu0 %v273
    %313 = vmatprep.subr.mxu0 0.0
    %314 = vmatpush1.msra.mxu0 %v272
    %315 = vmatprep.subr.mxu0 0.0
    %316 = vmatpush1.msra.mxu0 %v271
    %317 = vmatprep.subr.mxu0 0.0
    %318 = vmatpush1.msra.mxu0 %v270
    %319 = vmatprep.subr.mxu0 0.0
    %320 = vmatpush1.msra.mxu0 %v269
    %321 = vmatprep.subr.mxu0 0.0
    %322 = vmatpush1.msra.mxu0 %v268
    %323 = vmatprep.subr.mxu0 0.0
    %324 = vmatpush2.msra.mxu0 0.0
    %325 = vmatprep.subr.mxu0 0.0
    %326 = vmatpush2.msra.mxu0 0.0
    %327 = vmatprep.subr.mxu0 0.0
    %328 = vmatpush2.msra.mxu0 0.0
    %329 = vmatprep.subr.mxu0 0.0
    %330 = vmatpush2.msra.mxu0 0.0
    %331 = vmatprep.subr.mxu0 0.0
    %332 = vmatpush2.msra.mxu0 0.0
    %333 = vmatprep.subr.mxu0 0.0
    %334 = vmatpush2.msra.mxu0 0.0
    %335 = vmatprep.subr.mxu0 0.0
    %336 = vmatpush2.msra.mxu0 0.0
    %337 = vmatprep.subr.mxu0 0.0
    %338 = vmatpush2.msra.mxu0 0.0
    %339 = vmatprep.subr.mxu0 0.0
    %340 = vmatpush2.msra.mxu0 0.0
    %341 = vmatprep.subr.mxu0 0.0
    %342 = vmatpush2.msra.mxu0 0.0
    %343 = vmatprep.subr.mxu0 0.0
    %344 = vmatpush2.msra.mxu0 0.0
    %345 = vmatprep.subr.mxu0 0.0
    %346 = vmatpush2.msra.mxu0 0.0
    %347 = vmatprep.subr.mxu0 0.0
    %348 = vmatpush2.msra.mxu0 0.0
    %349 = vmatprep.subr.mxu0 0.0
    %350 = vmatpush2.msra.mxu0 0.0
    %351 = vmatprep.subr.mxu0 0.0
    %352 = vmatpush2.msra.mxu0 0.0
    %353 = vmatprep.subr.mxu0 0.0
    %354 = vmatpush2.msra.mxu0 0.0
    %355 = vmatprep.mubr.f32.mxu0 0.0
    %356 = vmatmul.mubr.f32.gmra.mxu0 %v267
    %v357 = vpop.f32.mrf.mxu0
    %v358 = vadd.f32 %v289, %v357
    %v359 = vpop.f32.mrf.mxu0
    %360 = vdwg.mxu0
    %361 = vst [vmem:[#allocation10] sm:$0xff] %v358
    // Predicated region
    $region46: #{tpu_custom_call.1} parent=1 // pred_check
      _
    $region47: #{tpu_custom_call.1} parent=1 // pred_check_branch
      %363 = sbr.rel (0) target = $region49
    $region48: #{tpu_custom_call.1} parent=1 // pred_region
      %s365 = ssub.s32 128, 128
      %366 = vsyncadd [#allocation4], %s365
      %s368 = sshll.u32 [#allocation10], 4
      %s369 = int_to_ptr.vmem [resolvable:$true] %s368
      %371 = dma.vmem_to_hbm [thread:$0]  %s369, 128, %s7, [#allocation4]
    $region49: #{tpu_custom_call.1} parent=1 // pred_fallthru
      _
    // Predicated region
    $region50: #{tpu_custom_call.1} parent=1 // pred_check
      _
    $region51: #{tpu_custom_call.1} parent=1 // pred_check_branch
      %373 = sbr.rel (0) target = $region53
    $region52: #{tpu_custom_call.1} parent=1 // pred_region
      %374 = dma.done [#allocation4], 128
    $region53: #{tpu_custom_call.1} parent=1 // pred_fallthru
      _
    %375 = vsyncpa [#allocation3], 1
    %376 = vsyncpa [#allocation6], 1
    %377 = vsyncpa [#allocation9], 1
    %378 = vsyncpa [#allocation4], 1

</llo_original>
